<compile_context>
chip_gen: v7x
topology: tpu7x:2x2x1
jax: 0.10.0
libtpu: 0.0.40
codegen_flags: <defaults>
</compile_context>

<pallas_src>
import math

import jax
import jax.numpy as jnp
from jax.experimental import pallas as pl
from jax.experimental.pallas import tpu as pltpu


def _round_up(v, m):
    return (v + m - 1) // m * m


# --------------------------------------------------------------------------
# Pallas kernel: fused 2-layer MLP head  relu(relu(x@W6+b6) @ W7 + b7)
# Grid = (row tiles, K tiles).  K axis is a reduction into an f32 accumulator;
# bias/ReLU/fc7 epilogue runs only on the last K step.
# --------------------------------------------------------------------------
def _mlp_head_kernel(x_ref, w6_ref, b6_ref, w7_ref, b7_ref, o_ref, acc_ref):
    k = pl.program_id(1)

    @pl.when(k == 0)
    def _():
        acc_ref[...] = jnp.zeros_like(acc_ref)

    # bf16 x bf16 -> f32 accumulation on the MXU.
    acc_ref[...] += jnp.dot(x_ref[...], w6_ref[...],
                            preferred_element_type=jnp.float32)

    @pl.when(k == pl.num_programs(1) - 1)
    def _():
        h = jnp.maximum(acc_ref[...] + b6_ref[...], 0.0)
        h = jnp.dot(h.astype(jnp.bfloat16), w7_ref[...],
                    preferred_element_type=jnp.float32)
        o_ref[...] = jnp.maximum(h + b7_ref[...], 0.0).astype(o_ref.dtype)


def mlp_head(x, w6, b6, w7, b7, *, tm=128, tk=512):
    """x: (N, Din) -> (N, Dh) float32.  Pads N and Din as needed."""
    N, Din = x.shape
    Dh = w6.shape[1]

    x = x.astype(jnp.bfloat16)
    w6 = w6.astype(jnp.bfloat16)
    w7 = w7.astype(jnp.bfloat16)
    b6 = b6.astype(jnp.float32).reshape(1, Dh)
    b7 = b7.astype(jnp.float32).reshape(1, Dh)

    # K tiling: tk multiple of 128, clamped to the (padded) reduction dim.
    tk = min(tk, _round_up(Din, 128))
    Kp = _round_up(Din, tk)
    Np = _round_up(N, tm)
    if Np != N or Kp != Din:
        x = jnp.pad(x, ((0, Np - N), (0, Kp - Din)))
    if Kp != Din:
        w6 = jnp.pad(w6, ((0, Kp - Din), (0, 0)))

    grid = (Np // tm, Kp // tk)

    out = pl.pallas_call(
        _mlp_head_kernel,
        out_shape=jax.ShapeDtypeStruct((Np, Dh), jnp.float32),
        grid_spec=pltpu.PrefetchScalarGridSpec(
            num_scalar_prefetch=0,
            grid=grid,
            in_specs=[
                pl.BlockSpec((tm, tk), lambda i, k: (i, k)),   # x
                pl.BlockSpec((tk, Dh), lambda i, k: (k, 0)),   # w6 (K-tiled)
                pl.BlockSpec((1, Dh), lambda i, k: (0, 0)),    # b6 (grid-invariant)
                pl.BlockSpec((Dh, Dh), lambda i, k: (0, 0)),   # w7 (grid-invariant)
                pl.BlockSpec((1, Dh), lambda i, k: (0, 0)),    # b7 (grid-invariant)
            ],
            out_specs=pl.BlockSpec((tm, Dh), lambda i, k: (i, 0)),
            scratch_shapes=[pltpu.VMEM((tm, Dh), jnp.float32)],
        ),
        compiler_params=pltpu.CompilerParams(
            dimension_semantics=("parallel", "arbitrary"),
            vmem_limit_bytes=64 * 1024 * 1024,
        ),
    )(x, w6, b6, w7, b7)
    return out[:N]


# --------------------------------------------------------------------------
# ROIAlign (single FPN level) glue in plain JAX, gathering only the bilinear
# corner points (no full feature-map copy per ROI).
# Semantics follow maskrcnn-benchmark / torchvision ROIAlign (aligned=False).
# TODO(synk): multi-level FPN LevelMapper and a window-DMA Pallas ROIAlign
#             (scalar-prefetch + make_async_copy) are not implemented.
# --------------------------------------------------------------------------
def _roi_align_single(feats_hwc, b, box, H, W, P, sr, spatial_scale):
    # feats_hwc: (B, H, W, C) channel-last; b: () int32; box: (4,) xyxy.
    x1 = box[0] * spatial_scale
    y1 = box[1] * spatial_scale
    x2 = box[2] * spatial_scale
    y2 = box[3] * spatial_scale
    roi_w = jnp.maximum(x2 - x1, 1.0)
    roi_h = jnp.maximum(y2 - y1, 1.0)
    bin_h = roi_h / P
    bin_w = roi_w / P

    offs = (jnp.arange(sr, dtype=jnp.float32) + 0.5) / sr          # (sr,)
    bins = jnp.arange(P, dtype=jnp.float32)[:, None]               # (P, 1)
    ys = (y1 + (bins + offs[None, :]) * bin_h).reshape(-1)         # (S,)
    xs = (x1 + (bins + offs[None, :]) * bin_w).reshape(-1)         # (S,)

    vy = (ys >= -1.0) & (ys <= H)
    vx = (xs >= -1.0) & (xs <= W)
    y = jnp.clip(ys, 0.0, H - 1)
    x = jnp.clip(xs, 0.0, W - 1)
    y0 = jnp.floor(y).astype(jnp.int32)
    x0 = jnp.floor(x).astype(jnp.int32)
    y1i = jnp.minimum(y0 + 1, H - 1)
    x1i = jnp.minimum(x0 + 1, W - 1)
    ly = y - y0.astype(jnp.float32)
    lx = x - x0.astype(jnp.float32)
    hy = 1.0 - ly
    hx = 1.0 - lx

    yi = jnp.stack([y0, y1i], axis=-1)     # (S, 2)
    xi = jnp.stack([x0, x1i], axis=-1)     # (S, 2)
    wy = jnp.stack([hy, ly], axis=-1)      # (S, 2)
    wx = jnp.stack([hx, lx], axis=-1)      # (S, 2)

    # Point gather of the 2x2 bilinear corners only: (S, 2, S, 2, C).
    vals = feats_hwc[b, yi[:, :, None, None], xi[None, None, :, :], :]
    w = wy[:, :, None, None] * wx[None, None, :, :]                 # (S,2,S,2)
    val = (vals * w[..., None]).sum(axis=(1, 3))                    # (S, S, C)
    val = val * (vy[:, None] & vx[None, :]).astype(jnp.float32)[..., None]

    val = val.reshape(P, sr, P, sr, -1).mean(axis=(1, 3))           # (P, P, C)
    return jnp.transpose(val, (2, 0, 1))                            # (C, P, P)


def pooler(features, proposals, *, resolution, sampling_ratio, spatial_scale):
    """features: (B, C, H, W); proposals: list of (n_i, 4) xyxy boxes per image.

    Returns (sum n_i, C, resolution, resolution)."""
    boxes = jnp.concatenate(proposals, axis=0)
    batch_idx = jnp.concatenate(
        [jnp.full((p.shape[0],), i, dtype=jnp.int32) for i, p in enumerate(proposals)]
    )
    B, C, H, W = features.shape
    feats_hwc = jnp.transpose(features, (0, 2, 3, 1))   # channel-last for the gather
    fn = jax.vmap(
        lambda b, box: _roi_align_single(
            feats_hwc, b, box, H, W, resolution, sampling_ratio, spatial_scale
        )
    )
    return fn(batch_idx, boxes)                          # (N, C, P, P)


# --------------------------------------------------------------------------
# Module wrapper
# --------------------------------------------------------------------------
class FPN2MLPFeatureExtractorPallas:
    def __init__(self, key, in_channels, resolution, scales, sampling_ratio,
                 representation_size):
        self.resolution = resolution
        self.scales = scales
        self.sampling_ratio = sampling_ratio
        self.out_channels = representation_size
        input_size = in_channels * resolution ** 2

        def kaiming_uniform(k, fan_in, fan_out, a=1.0):
            # matches make_fc: nn.init.kaiming_uniform_(weight, a=1), bias = 0
            bound = math.sqrt(6.0 / ((1 + a * a) * fan_in))
            return jax.random.uniform(k, (fan_in, fan_out), jnp.float32,
                                      minval=-bound, maxval=bound)

        k6, k7 = jax.random.split(key)
        # Weights stored in bf16 (MXU-native); biases kept in f32.
        self.w6 = kaiming_uniform(k6, input_size, representation_size).astype(jnp.bfloat16)
        self.b6 = jnp.zeros((1, representation_size), jnp.float32)
        self.w7 = kaiming_uniform(k7, representation_size, representation_size).astype(jnp.bfloat16)
        self.b7 = jnp.zeros((1, representation_size), jnp.float32)

    def __call__(self, x, proposals):
        # x: list of FPN feature maps (single level here), NCHW
        pooled = pooler(
            x[0], proposals,
            resolution=self.resolution,
            sampling_ratio=self.sampling_ratio,
            spatial_scale=self.scales[0],
        )                                              # (N, C, R, R)
        flat = pooled.reshape(pooled.shape[0], -1)     # (N, C*R*R), NCHW order
        return mlp_head(flat, self.w6, self.b6, self.w7, self.b7)


# --------------------------------------------------------------------------
if __name__ == "__main__":
    key = jax.random.PRNGKey(0)
    k_feat, k_box1, k_box2, k_params = jax.random.split(key, 4)

    # synthetic cfg
    in_channels = 8
    resolution = 4
    scales = (0.25,)
    sampling_ratio = 2
    representation_size = 128

    B, H, W = 2, 16, 16          # feature map spatial; image size = 64x64
    img_size = 64.0

    features = [jax.random.normal(k_feat, (B, in_channels, H, W), jnp.float32)]

    def make_boxes(k, n):
        pts = jax.random.uniform(k, (n, 4), jnp.float32, 0.0, img_size)
        x1 = jnp.minimum(pts[:, 0], pts[:, 2])
        x2 = jnp.maximum(pts[:, 0], pts[:, 2])
        y1 = jnp.minimum(pts[:, 1], pts[:, 3])
        y2 = jnp.maximum(pts[:, 1], pts[:, 3])
        return jnp.stack([x1, y1, x2, y2], axis=1)

    proposals = [make_boxes(k_box1, 4), make_boxes(k_box2, 4)]   # 8 rois total

    extractor = FPN2MLPFeatureExtractorPallas(
        k_params, in_channels, resolution, scales, sampling_ratio,
        representation_size,
    )

    out = extractor(features, proposals)
    out = jax.block_until_ready(out)

    assert out.shape == (8, representation_size), out.shape
    assert out.dtype == jnp.float32
    assert bool(jnp.all(jnp.isfinite(out)))
    assert bool(jnp.all(out >= 0.0))   # final ReLU
    print("KERNEL_OK")
</pallas_src>

<mosaic_0001>
module attributes {stable_mosaic.version = 11 : i64} {
  func.func @_mlp_head_kernel(%arg0: i32, %arg1: i32, %arg2: memref<128x128xbf16, #tpu.memory_space<vmem>>, %arg3: memref<128x128xbf16, #tpu.memory_space<vmem>>, %arg4: memref<1x128xf32, #tpu.memory_space<vmem>>, %arg5: memref<128x128xbf16, #tpu.memory_space<vmem>>, %arg6: memref<1x128xf32, #tpu.memory_space<vmem>>, %arg7: memref<128x128xf32, #tpu.memory_space<vmem>>, %arg8: memref<128x128xf32, #tpu.memory_space<vmem>>) attributes {dimension_semantics = [#tpu.dimension_semantics<parallel>, #tpu.dimension_semantics<arbitrary>], iteration_bounds = array<i64: 1, 1>, scalar_prefetch = 0 : i64, scratch_operands = 1 : i64, tpu.core_type = #tpu.core_type<tc>, window_params = [{transform_indices = @transform_0, window_bounds = array<i64: 128, 128>}, {transform_indices = @transform_1, window_bounds = array<i64: 128, 128>}, {pipeline_mode = #tpu.pipeline_mode<synchronous>, transform_indices = @transform_2, window_bounds = array<i64: 1, 128>}, {pipeline_mode = #tpu.pipeline_mode<synchronous>, transform_indices = @transform_3, window_bounds = array<i64: 128, 128>}, {pipeline_mode = #tpu.pipeline_mode<synchronous>, transform_indices = @transform_4, window_bounds = array<i64: 1, 128>}, {transform_indices = @transform_5, window_bounds = array<i64: 128, 128>}]} {
    %c0_i32 = arith.constant 0 : i32
    %0 = arith.cmpi eq, %arg1, %c0_i32 : i32
    %1 = arith.extui %0 : i1 to i32
    %c0_i32_0 = arith.constant 0 : i32
    %2 = arith.cmpi ne, %1, %c0_i32_0 : i32
    scf.if %2 {
      %cst_10 = arith.constant 0.000000e+00 : f32
      %12 = vector.broadcast %cst_10 : f32 to vector<128x128xf32>
      %c0_11 = arith.constant 0 : index
      %c0_12 = arith.constant 0 : index
      %13 = vector.load %arg8[%c0_11, %c0_12] : memref<128x128xf32, #tpu.memory_space<vmem>>, vector<128x128xf32>
      tpu.vector_store %arg8[%c0_11, %c0_12], %12 {strides = array<i32>} : memref<128x128xf32, #tpu.memory_space<vmem>>, vector<128x128xf32>,
    } else {
    }
    %c0 = arith.constant 0 : index
    %c0_1 = arith.constant 0 : index
    %3 = vector.load %arg8[%c0, %c0_1] : memref<128x128xf32, #tpu.memory_space<vmem>>, vector<128x128xf32>
    %c0_2 = arith.constant 0 : index
    %c0_3 = arith.constant 0 : index
    %4 = vector.load %arg2[%c0_2, %c0_3] : memref<128x128xbf16, #tpu.memory_space<vmem>>, vector<128x128xbf16>
    %c0_4 = arith.constant 0 : index
    %c0_5 = arith.constant 0 : index
    %5 = vector.load %arg3[%c0_4, %c0_5] : memref<128x128xbf16, #tpu.memory_space<vmem>>, vector<128x128xbf16>
    %cst = arith.constant dense<0.000000e+00> : vector<128x128xf32>
    %6 = tpu.matmul %4, %5, %cst {dimension_numbers = #tpu.dot_dimension_numbers<[1], [0], [0], [1], [0, 0, 1, 1], [], []>} : vector<128x128xbf16>, vector<128x128xbf16>, vector<128x128xf32> -> vector<128x128xf32>
    %7 = arith.addf %3, %6 : vector<128x128xf32>
    %c0_6 = arith.constant 0 : index
    %c0_7 = arith.constant 0 : index
    %8 = vector.load %arg8[%c0_6, %c0_7] : memref<128x128xf32, #tpu.memory_space<vmem>>, vector<128x128xf32>
    tpu.vector_store %arg8[%c0_6, %c0_7], %7 {strides = array<i32>} : memref<128x128xf32, #tpu.memory_space<vmem>>, vector<128x128xf32>,
    %c0_i32_8 = arith.constant 0 : i32
    %9 = arith.cmpi eq, %arg1, %c0_i32_8 : i32
    %10 = arith.extui %9 : i1 to i32
    %c0_i32_9 = arith.constant 0 : i32
    %11 = arith.cmpi ne, %10, %c0_i32_9 : i32
    scf.if %11 {
      %c0_10 = arith.constant 0 : index
      %c0_11 = arith.constant 0 : index
      %12 = vector.load %arg8[%c0_10, %c0_11] : memref<128x128xf32, #tpu.memory_space<vmem>>, vector<128x128xf32>
      %c0_12 = arith.constant 0 : index
      %c0_13 = arith.constant 0 : index
      %13 = vector.load %arg4[%c0_12, %c0_13] : memref<1x128xf32, #tpu.memory_space<vmem>>, vector<1x128xf32>
      %14 = vector.broadcast %13 : vector<1x128xf32> to vector<128x128xf32>
      %15 = arith.addf %12, %14 : vector<128x128xf32>
      %cst_14 = arith.constant 0.000000e+00 : f32
      %16 = vector.broadcast %cst_14 : f32 to vector<128x128xf32>
      %17 = arith.maximumf %15, %16 : vector<128x128xf32>
      %18 = arith.truncf %17 : vector<128x128xf32> to vector<128x128xbf16>
      %c0_15 = arith.constant 0 : index
      %c0_16 = arith.constant 0 : index
      %19 = vector.load %arg5[%c0_15, %c0_16] : memref<128x128xbf16, #tpu.memory_space<vmem>>, vector<128x128xbf16>
      %cst_17 = arith.constant dense<0.000000e+00> : vector<128x128xf32>
      %20 = tpu.matmul %18, %19, %cst_17 {dimension_numbers = #tpu.dot_dimension_numbers<[1], [0], [0], [1], [0, 0, 1, 1], [], []>} : vector<128x128xbf16>, vector<128x128xbf16>, vector<128x128xf32> -> vector<128x128xf32>
      %c0_18 = arith.constant 0 : index
      %c0_19 = arith.constant 0 : index
      %21 = vector.load %arg6[%c0_18, %c0_19] : memref<1x128xf32, #tpu.memory_space<vmem>>, vector<1x128xf32>
      %22 = vector.broadcast %21 : vector<1x128xf32> to vector<128x128xf32>
      %23 = arith.addf %20, %22 : vector<128x128xf32>
      %cst_20 = arith.constant 0.000000e+00 : f32
      %24 = vector.broadcast %cst_20 : f32 to vector<128x128xf32>
      %25 = arith.maximumf %23, %24 : vector<128x128xf32>
      %c0_21 = arith.constant 0 : index
      %c0_22 = arith.constant 0 : index
      %26 = vector.load %arg7[%c0_21, %c0_22] : memref<128x128xf32, #tpu.memory_space<vmem>>, vector<128x128xf32>
      tpu.vector_store %arg7[%c0_21, %c0_22], %25 {strides = array<i32>} : memref<128x128xf32, #tpu.memory_space<vmem>>, vector<128x128xf32>,
    } else {
    }
    return
  }
  func.func @transform_0(%arg0: i32, %arg1: i32) -> (i32, i32) {
    %c0_i32 = arith.constant 0 : i32
    return %arg0, %arg1 : i32, i32
  }
  func.func @transform_1(%arg0: i32, %arg1: i32) -> (i32, i32) {
    %c0_i32 = arith.constant 0 : i32
    %c0_i32_0 = arith.constant 0 : i32
    return %arg1, %c0_i32 : i32, i32
  }
  func.func @transform_2(%arg0: i32, %arg1: i32) -> (i32, i32) {
    %c0_i32 = arith.constant 0 : i32
    %c0_i32_0 = arith.constant 0 : i32
    %c0_i32_1 = arith.constant 0 : i32
    return %c0_i32, %c0_i32_0 : i32, i32
  }
  func.func @transform_3(%arg0: i32, %arg1: i32) -> (i32, i32) {
    %c0_i32 = arith.constant 0 : i32
    %c0_i32_0 = arith.constant 0 : i32
    %c0_i32_1 = arith.constant 0 : i32
    return %c0_i32, %c0_i32_0 : i32, i32
  }
  func.func @transform_4(%arg0: i32, %arg1: i32) -> (i32, i32) {
    %c0_i32 = arith.constant 0 : i32
    %c0_i32_0 = arith.constant 0 : i32
    %c0_i32_1 = arith.constant 0 : i32
    return %c0_i32, %c0_i32_0 : i32, i32
  }
  func.func @transform_5(%arg0: i32, %arg1: i32) -> (i32, i32) {
    %c0_i32 = arith.constant 0 : i32
    %c0_i32_0 = arith.constant 0 : i32
    return %arg0, %c0_i32 : i32, i32
  }
}

</mosaic_0001>

<llo_original>
// kernel: tpu_custom_call.1
$region0: #{tpu_custom_call.1}
  #allocation0 [shape = 'u32[]', space=smem, size = 0x4, offset = 0x4, fixed_abs, tag = 'smem constant byte address 0x4 - core index']
  #allocation1 [shape = 'u32[144,128]{1,0:T(1,128)}', space=vmem, size = 0x12000, scoped, tag = 'internal scratch']
  #allocation2 [shape = 'f32[128,128]{1,0:T(8,128)}', space=vmem, size = 0x10000, scoped, tag = 'scratch operand']
  %s0 = inlined_call_operand.hbm [shape: bf16[128,128], index: 0, kind: input, shape index: {}]
  %s1 = inlined_call_operand.hbm [shape: bf16[128,128], index: 1, kind: input, shape index: {}]
  %s2 = inlined_call_operand.hbm [shape: f32[1,128], index: 2, kind: input, shape index: {}]
  %s3 = inlined_call_operand.hbm [shape: bf16[128,128], index: 3, kind: input, shape index: {}]
  %s4 = inlined_call_operand.hbm [shape: f32[1,128], index: 4, kind: input, shape index: {}]
  %s5 = inlined_call_operand.hbm [shape: f32[128,128], index: 5, kind: output, shape index: {}]
  %s6 = sld [smem:[#allocation0]]
  $region58: #{tpu_custom_call.1} parent=0
    _
  %s8 = ssub.s32 1, %s6
  %s9 = scalar_select 0, %s8, %s6
  $region1: #{tpu_custom_call.1} parent=0
    #allocation3 [shape = 'u8[32768]{0}', space=vmem, size = 0x8000, scoped, tag = 'input window, operand 0, single buffered']
    #allocation4 [shape = 's32[1]{0}', space=sflag, size = 0x4, scoped, tag = 'scoped memory for tpu_custom_call.1']
    #allocation5 [shape = 's32[1]{0}', space=sflag, size = 0x4, scoped, tag = 'scoped memory for tpu_custom_call.1']
    #allocation6 [shape = 'u8[32768]{0}', space=vmem, size = 0x8000, scoped, tag = 'input window, operand 1, single buffered']
    #allocation7 [shape = 's32[1]{0}', space=sflag, size = 0x4, scoped, tag = 'scoped memory for tpu_custom_call.1']
    #allocation8 [shape = 'u8[512]{0}', space=vmem, size = 0x400, scoped, tag = 'input window, operand 2, single buffered']
    #allocation9 [shape = 'u8[32768]{0}', space=vmem, size = 0x8000, scoped, tag = 'input window, operand 3, single buffered']
    #allocation10 [shape = 's32[1]{0}', space=sflag, size = 0x4, scoped, tag = 'scoped memory for tpu_custom_call.1']
    #allocation11 [shape = 'u8[512]{0}', space=vmem, size = 0x400, scoped, tag = 'input window, operand 4, single buffered']
    #allocation12 [shape = 'u8[65536]{0}', space=vmem, size = 0x10000, scoped, tag = 'output window, operand 0, single buffered']
    %10 = vsyncpa [#allocation4], 0
    %11 = vsyncpa [#allocation7], 0
    %12 = vsyncpa [#allocation10], 0
    %13 = vsyncpa [#allocation5], 0
    // Predicated region
    $region2: #{tpu_custom_call.1} parent=1 // pred_check
      _
    $region3: #{tpu_custom_call.1} parent=1 // pred_check_branch
      %15 = sbr.rel (0) target = $region5
    $region4: #{tpu_custom_call.1} parent=1 // pred_region
      %s17 = ssub.s32 1024, 1024
      %18 = vsyncadd [#allocation4], %s17
      %s19 = sshll.u32 [#allocation3], 4
      %s20 = int_to_ptr.vmem [resolvable:$true] %s19
      %25 = dma.hbm_to_vmem [thread:$0]  %s0, 1024, %s20, [#allocation4], 64, 64, 4
    $region5: #{tpu_custom_call.1} parent=1 // pred_fallthru
      _
    // Predicated region
    $region6: #{tpu_custom_call.1} parent=1 // pred_check
      _
    $region7: #{tpu_custom_call.1} parent=1 // pred_check_branch
      %27 = sbr.rel (0) target = $region9
    $region8: #{tpu_custom_call.1} parent=1 // pred_region
      %s29 = ssub.s32 1024, 1024
      %30 = vsyncadd [#allocation7], %s29
      %s31 = sshll.u32 [#allocation6], 4
      %s32 = int_to_ptr.vmem [resolvable:$true] %s31
      %37 = dma.hbm_to_vmem [thread:$0]  %s1, 1024, %s32, [#allocation7], 64, 64, 4
    $region9: #{tpu_custom_call.1} parent=1 // pred_fallthru
      _
    // Predicated region
    $region10: #{tpu_custom_call.1} parent=1 // pred_check
      _
    $region11: #{tpu_custom_call.1} parent=1 // pred_check_branch
      %39 = sbr.rel (0) target = $region13
    $region12: #{tpu_custom_call.1} parent=1 // pred_region
      %s41 = ssub.s32 16, 16
      %42 = vsyncadd [#allocation7], %s41
      %s44 = sshll.u32 [#allocation8], 4
      %s45 = int_to_ptr.vmem [resolvable:$true] %s44
      %47 = dma.hbm_to_vmem [thread:$0]  %s2, 16, %s45, [#allocation7]
    $region13: #{tpu_custom_call.1} parent=1 // pred_fallthru
      _
    // Predicated region
    $region14: #{tpu_custom_call.1} parent=1 // pred_check
      _
    $region15: #{tpu_custom_call.1} parent=1 // pred_check_branch
      %49 = sbr.rel (0) target = $region17
    $region16: #{tpu_custom_call.1} parent=1 // pred_region
      %s51 = ssub.s32 1024, 1024
      %52 = vsyncadd [#allocation10], %s51
      %s53 = sshll.u32 [#allocation9], 4
      %s54 = int_to_ptr.vmem [resolvable:$true] %s53
      %59 = dma.hbm_to_vmem [thread:$0]  %s3, 1024, %s54, [#allocation10], 64, 64, 4
    $region17: #{tpu_custom_call.1} parent=1 // pred_fallthru
      _
    // Predicated region
    $region18: #{tpu_custom_call.1} parent=1 // pred_check
      _
    $region19: #{tpu_custom_call.1} parent=1 // pred_check_branch
      %61 = sbr.rel (0) target = $region21
    $region20: #{tpu_custom_call.1} parent=1 // pred_region
      %s63 = ssub.s32 16, 16
      %64 = vsyncadd [#allocation10], %s63
      %s66 = sshll.u32 [#allocation11], 4
      %s67 = int_to_ptr.vmem [resolvable:$true] %s66
      %69 = dma.hbm_to_vmem [thread:$0]  %s4, 16, %s67, [#allocation10]
    $region21: #{tpu_custom_call.1} parent=1 // pred_fallthru
      _
    // Predicated region
    $region22: #{tpu_custom_call.1} parent=1 // pred_check
      _
    $region23: #{tpu_custom_call.1} parent=1 // pred_check_branch
      %71 = sbr.rel (0) target = $region25
    $region24: #{tpu_custom_call.1} parent=1 // pred_region
      %72 = dma.done [#allocation4], 1024
    $region25: #{tpu_custom_call.1} parent=1 // pred_fallthru
      _
    // Predicated region
    $region26: #{tpu_custom_call.1} parent=1 // pred_check
      _
    $region27: #{tpu_custom_call.1} parent=1 // pred_check_branch
      %74 = sbr.rel (0) target = $region29
    $region28: #{tpu_custom_call.1} parent=1 // pred_region
      %75 = dma.done [#allocation7], 1024
    $region29: #{tpu_custom_call.1} parent=1 // pred_fallthru
      _
    // Predicated region
    $region30: #{tpu_custom_call.1} parent=1 // pred_check
      _
    $region31: #{tpu_custom_call.1} parent=1 // pred_check_branch
      %77 = sbr.rel (0) target = $region33
    $region32: #{tpu_custom_call.1} parent=1 // pred_region
      %78 = dma.done [#allocation7], 16
    $region33: #{tpu_custom_call.1} parent=1 // pred_fallthru
      _
    // Predicated region
    $region34: #{tpu_custom_call.1} parent=1 // pred_check
      _
    $region35: #{tpu_custom_call.1} parent=1 // pred_check_branch
      %80 = sbr.rel (0) target = $region37
    $region36: #{tpu_custom_call.1} parent=1 // pred_region
      %81 = dma.done [#allocation10], 1024
    $region37: #{tpu_custom_call.1} parent=1 // pred_fallthru
      _
    // Predicated region
    $region38: #{tpu_custom_call.1} parent=1 // pred_check
      _
    $region39: #{tpu_custom_call.1} parent=1 // pred_check_branch
      %83 = sbr.rel (0) target = $region41
    $region40: #{tpu_custom_call.1} parent=1 // pred_region
      %84 = dma.done [#allocation10], 16
    $region41: #{tpu_custom_call.1} parent=1 // pred_fallthru
      _
    %p86 = scmp.eq.s32.totalorder 0, 0
    // Predicated region
    $region42: #{tpu_custom_call.1} parent=1 // pred_check
      %p87 = pneg %p86
    $region43: #{tpu_custom_call.1} parent=1 // pred_check_branch
      %89 = sbr.rel (%p87) target = $region45
    $region44: #{tpu_custom_call.1} parent=1 // pred_region
      %90 = vst [vmem:[#allocation2] sm:$0xff] 0.0
      %91 = vst [vmem:[#allocation2 + $0x8] sm:$0xff] 0.0
      %92 = vst [vmem:[#allocation2 + $0x10] sm:$0xff] 0.0
      %93 = vst [vmem:[#allocation2 + $0x18] sm:$0xff] 0.0
      %94 = vst [vmem:[#allocation2 + $0x20] sm:$0xff] 0.0
      %95 = vst [vmem:[#allocation2 + $0x28] sm:$0xff] 0.0
      %96 = vst [vmem:[#allocation2 + $0x30] sm:$0xff] 0.0
      %97 = vst [vmem:[#allocation2 + $0x38] sm:$0xff] 0.0
      %98 = vst [vmem:[#allocation2 + $0x40] sm:$0xff] 0.0
      %99 = vst [vmem:[#allocation2 + $0x48] sm:$0xff] 0.0
      %100 = vst [vmem:[#allocation2 + $0x50] sm:$0xff] 0.0
      %101 = vst [vmem:[#allocation2 + $0x58] sm:$0xff] 0.0
      %102 = vst [vmem:[#allocation2 + $0x60] sm:$0xff] 0.0
      %103 = vst [vmem:[#allocation2 + $0x68] sm:$0xff] 0.0
      %104 = vst [vmem:[#allocation2 + $0x70] sm:$0xff] 0.0
      %105 = vst [vmem:[#allocation2 + $0x78] sm:$0xff] 0.0
    $region45: #{tpu_custom_call.1} parent=1 // pred_fallthru
      _
    %v106 = vld [vmem:[#allocation2] sm:$0xff]
    %v107 = vld [vmem:[#allocation2 + $0x8] sm:$0xff]
    %v108 = vld [vmem:[#allocation2 + $0x10] sm:$0xff]
    %v109 = vld [vmem:[#allocation2 + $0x18] sm:$0xff]
    %v110 = vld [vmem:[#allocation2 + $0x20] sm:$0xff]
    %v111 = vld [vmem:[#allocation2 + $0x28] sm:$0xff]
    %v112 = vld [vmem:[#allocation2 + $0x30] sm:$0xff]
    %v113 = vld [vmem:[#allocation2 + $0x38] sm:$0xff]
    %v114 = vld [vmem:[#allocation2 + $0x40] sm:$0xff]
    %v115 = vld [vmem:[#allocation2 + $0x48] sm:$0xff]
    %v116 = vld [vmem:[#allocation2 + $0x50] sm:$0xff]
    %v117 = vld [vmem:[#allocation2 + $0x58] sm:$0xff]
    %v118 = vld [vmem:[#allocation2 + $0x60] sm:$0xff]
    %v119 = vld [vmem:[#allocation2 + $0x68] sm:$0xff]
    %v120 = vld [vmem:[#allocation2 + $0x70] sm:$0xff]
    %v121 = vld [vmem:[#allocation2 + $0x78] sm:$0xff]
    %v122 = vld [vmem:[#allocation3] sm:$0xf]
    %v123 = vld [vmem:[#allocation3 + $0x4] sm:$0xf]
    %v124 = vld [vmem:[#allocation3 + $0x8] sm:$0xf]
    %v125 = vld [vmem:[#allocation3 + $0xc] sm:$0xf]
    %v126 = vld [vmem:[#allocation3 + $0x10] sm:$0xf]
    %v127 = vld [vmem:[#allocation3 + $0x14] sm:$0xf]
    %v128 = vld [vmem:[#allocation3 + $0x18] sm:$0xf]
    %v129 = vld [vmem:[#allocation3 + $0x1c] sm:$0xf]
    %v130 = vld [vmem:[#allocation3 + $0x20] sm:$0xf]
    %v131 = vld [vmem:[#allocation3 + $0x24] sm:$0xf]
    %v132 = vld [vmem:[#allocation3 + $0x28] sm:$0xf]
    %v133 = vld [vmem:[#allocation3 + $0x2c] sm:$0xf]
    %v134 = vld [vmem:[#allocation3 + $0x30] sm:$0xf]
    %v135 = vld [vmem:[#allocation3 + $0x34] sm:$0xf]
    %v136 = vld [vmem:[#allocation3 + $0x38] sm:$0xf]
    %v137 = vld [vmem:[#allocation3 + $0x3c] sm:$0xf]
    %v138 = vld [vmem:[#allocation6] sm:$0xf]
    %v139 = vld [vmem:[#allocation6 + $0x4] sm:$0xf]
    %v140 = vld [vmem:[#allocation6 + $0x8] sm:$0xf]
    %v141 = vld [vmem:[#allocation6 + $0xc] sm:$0xf]
    %v142 = vld [vmem:[#allocation6 + $0x10] sm:$0xf]
    %v143 = vld [vmem:[#allocation6 + $0x14] sm:$0xf]
    %v144 = vld [vmem:[#allocation6 + $0x18] sm:$0xf]
    %v145 = vld [vmem:[#allocation6 + $0x1c] sm:$0xf]
    %v146 = vld [vmem:[#allocation6 + $0x20] sm:$0xf]
    %v147 = vld [vmem:[#allocation6 + $0x24] sm:$0xf]
    %v148 = vld [vmem:[#allocation6 + $0x28] sm:$0xf]
    %v149 = vld [vmem:[#allocation6 + $0x2c] sm:$0xf]
    %v150 = vld [vmem:[#allocation6 + $0x30] sm:$0xf]
    %v151 = vld [vmem:[#allocation6 + $0x34] sm:$0xf]
    %v152 = vld [vmem:[#allocation6 + $0x38] sm:$0xf]
    %v153 = vld [vmem:[#allocation6 + $0x3c] sm:$0xf]
    %v170 = vunpack.c.l.b16 %v122
    %v171 = vunpack.c.l.b16 %v123
    %v172 = vunpack.c.l.b16 %v124
    %v173 = vunpack.c.l.b16 %v125
    %v174 = vunpack.c.l.b16 %v126
    %v175 = vunpack.c.l.b16 %v127
    %v176 = vunpack.c.l.b16 %v128
    %v177 = vunpack.c.l.b16 %v129
    %v178 = vunpack.c.l.b16 %v130
    %v179 = vunpack.c.l.b16 %v131
    %v180 = vunpack.c.l.b16 %v132
    %v181 = vunpack.c.l.b16 %v133
    %v182 = vunpack.c.l.b16 %v134
    %v183 = vunpack.c.l.b16 %v135
    %v184 = vunpack.c.l.b16 %v136
    %v185 = vunpack.c.l.b16 %v137
    %v186 = vpack.c.b16 %v171, %v170
    %v187 = vpack.c.b16 %v173, %v172
    %v188 = vpack.c.b16 %v175, %v174
    %v189 = vpack.c.b16 %v177, %v176
    %v190 = vpack.c.b16 %v179, %v178
    %v191 = vpack.c.b16 %v181, %v180
    %v192 = vpack.c.b16 %v183, %v182
    %v193 = vpack.c.b16 %v185, %v184
    %v218 = vunpack.c.l.b16 %v138
    %v219 = vunpack.c.l.b16 %v139
    %v220 = vunpack.c.l.b16 %v140
    %v221 = vunpack.c.l.b16 %v141
    %v222 = vunpack.c.l.b16 %v142
    %v223 = vunpack.c.l.b16 %v143
    %v224 = vunpack.c.l.b16 %v144
    %v225 = vunpack.c.l.b16 %v145
    %v226 = vunpack.c.l.b16 %v146
    %v227 = vunpack.c.l.b16 %v147
    %v228 = vunpack.c.l.b16 %v148
    %v229 = vunpack.c.l.b16 %v149
    %v230 = vunpack.c.l.b16 %v150
    %v231 = vunpack.c.l.b16 %v151
    %v232 = vunpack.c.l.b16 %v152
    %v233 = vunpack.c.l.b16 %v153
    %v234 = vpack.c.b16 %v219, %v218
    %v235 = vpack.c.b16 %v221, %v220
    %v236 = vpack.c.b16 %v223, %v222
    %v237 = vpack.c.b16 %v225, %v224
    %v238 = vpack.c.b16 %v227, %v226
    %v239 = vpack.c.b16 %v229, %v228
    %v240 = vpack.c.b16 %v231, %v230
    %v241 = vpack.c.b16 %v233, %v232
    %250 = vmatprep.subr.bf16.mxu0 0
    %251 = vmatpush1.bf16.msra.mxu0 %v234
    %252 = vmatprep.subr.bf16.mxu0 0
    %253 = vmatpush1.bf16.msra.mxu0 %v235
    %254 = vmatprep.subr.bf16.mxu0 0
    %255 = vmatpush1.bf16.msra.mxu0 %v236
    %256 = vmatprep.subr.bf16.mxu0 0
    %257 = vmatpush1.bf16.msra.mxu0 %v237
    %258 = vmatprep.subr.bf16.mxu0 0
    %259 = vmatpush1.bf16.msra.mxu0 %v238
    %260 = vmatprep.subr.bf16.mxu0 0
    %261 = vmatpush1.bf16.msra.mxu0 %v239
    %262 = vmatprep.subr.bf16.mxu0 0
    %263 = vmatpush1.bf16.msra.mxu0 %v240
    %264 = vmatprep.subr.bf16.mxu0 0
    %265 = vmatpush1.bf16.msra.mxu0 %v241
    %266 = vmatprep.subr.bf16.mxu0 0
    %267 = vmatpush1.bf16.msra.mxu0 0
    %268 = vmatprep.subr.bf16.mxu0 0
    %269 = vmatpush1.bf16.msra.mxu0 0
    %270 = vmatprep.subr.bf16.mxu0 0
    %271 = vmatpush1.bf16.msra.mxu0 0
    %272 = vmatprep.subr.bf16.mxu0 0
    %273 = vmatpush1.bf16.msra.mxu0 0
    %274 = vmatprep.subr.bf16.mxu0 0
    %275 = vmatpush1.bf16.msra.mxu0 0
    %276 = vmatprep.subr.bf16.mxu0 0
    %277 = vmatpush1.bf16.msra.mxu0 0
    %278 = vmatprep.subr.bf16.mxu0 0
    %279 = vmatpush1.bf16.msra.mxu0 0
    %280 = vmatprep.subr.bf16.mxu0 0
    %281 = vmatpush1.bf16.msra.mxu0 0
    %282 = vmatprep.mubr.bf16.mxu0 0
    %283 = vmatmul.mubr.bf16.gmra.mrb[0].mxu0 %v186
    %v284 = vpop.f32.mrb[0].mxu0
    %v285 = vadd.f32 0.0, %v284
    %v286 = vpop.f32.mrb[0].mxu0
    %v287 = vpop.f32.mrb[0].mxu0
    %v288 = vadd.f32 0.0, %v287
    %v289 = vpop.f32.mrb[0].mxu0
    %290 = vmatprep.mubr.bf16.mxu0 0
    %291 = vmatmul.mubr.bf16.gmra.mrb[0].mxu0 %v187
    %v292 = vpop.f32.mrb[0].mxu0
    %v293 = vadd.f32 0.0, %v292
    %v294 = vpop.f32.mrb[0].mxu0
    %v295 = vpop.f32.mrb[0].mxu0
    %v296 = vadd.f32 0.0, %v295
    %v297 = vpop.f32.mrb[0].mxu0
    %298 = vmatprep.mubr.bf16.mxu0 0
    %299 = vmatmul.mubr.bf16.gmra.mrb[0].mxu0 %v188
    %v300 = vpop.f32.mrb[0].mxu0
    %v301 = vadd.f32 0.0, %v300
    %v302 = vpop.f32.mrb[0].mxu0
    %v303 = vpop.f32.mrb[0].mxu0
    %v304 = vadd.f32 0.0, %v303
    %v305 = vpop.f32.mrb[0].mxu0
    %306 = vmatprep.mubr.bf16.mxu0 0
    %307 = vmatmul.mubr.bf16.gmra.mrb[0].mxu0 %v189
    %v308 = vpop.f32.mrb[0].mxu0
    %v309 = vadd.f32 0.0, %v308
    %v310 = vpop.f32.mrb[0].mxu0
    %v311 = vpop.f32.mrb[0].mxu0
    %v312 = vadd.f32 0.0, %v311
    %v313 = vpop.f32.mrb[0].mxu0
    %314 = vmatprep.mubr.bf16.mxu0 0
    %315 = vmatmul.mubr.bf16.gmra.mrb[0].mxu0 %v190
    %v316 = vpop.f32.mrb[0].mxu0
    %v317 = vadd.f32 0.0, %v316
    %v318 = vpop.f32.mrb[0].mxu0
    %v319 = vpop.f32.mrb[0].mxu0
    %v320 = vadd.f32 0.0, %v319
    %v321 = vpop.f32.mrb[0].mxu0
    %322 = vmatprep.mubr.bf16.mxu0 0
    %323 = vmatmul.mubr.bf16.gmra.mrb[0].mxu0 %v191
    %v324 = vpop.f32.mrb[0].mxu0
    %v325 = vadd.f32 0.0, %v324
    %v326 = vpop.f32.mrb[0].mxu0
    %v327 = vpop.f32.mrb[0].mxu0
    %v328 = vadd.f32 0.0, %v327
    %v329 = vpop.f32.mrb[0].mxu0
    %330 = vmatprep.mubr.bf16.mxu0 0
    %331 = vmatmul.mubr.bf16.gmra.mrb[0].mxu0 %v192
    %v332 = vpop.f32.mrb[0].mxu0
    %v333 = vadd.f32 0.0, %v332
    %v334 = vpop.f32.mrb[0].mxu0
    %v335 = vpop.f32.mrb[0].mxu0
    %v336 = vadd.f32 0.0, %v335
    %v337 = vpop.f32.mrb[0].mxu0
    %338 = vmatprep.mubr.bf16.mxu0 0
    %339 = vmatmul.mubr.bf16.gmra.mrb[0].mxu0 %v193
    %v340 = vpop.f32.mrb[0].mxu0
    %v341 = vadd.f32 0.0, %v340
    %v342 = vpop.f32.mrb[0].mxu0
    %v343 = vpop.f32.mrb[0].mxu0
    %v344 = vadd.f32 0.0, %v343
    %v345 = vpop.f32.mrb[0].mxu0
    %346 = vdwg.mxu0
    %v347 = vadd.f32 %v106, %v285
    %v348 = vadd.f32 %v107, %v288
    %v349 = vadd.f32 %v108, %v293
    %v350 = vadd.f32 %v109, %v296
    %v351 = vadd.f32 %v110, %v301
    %v352 = vadd.f32 %v111, %v304
    %v353 = vadd.f32 %v112, %v309
    %v354 = vadd.f32 %v113, %v312
    %v355 = vadd.f32 %v114, %v317
    %v356 = vadd.f32 %v115, %v320
    %v357 = vadd.f32 %v116, %v325
    %v358 = vadd.f32 %v117, %v328
    %v359 = vadd.f32 %v118, %v333
    %v360 = vadd.f32 %v119, %v336
    %v361 = vadd.f32 %v120, %v341
    %v362 = vadd.f32 %v121, %v344
    %363 = vst [vmem:[#allocation2] sm:$0xff] %v347
    %364 = vst [vmem:[#allocation2 + $0x8] sm:$0xff] %v348
    %365 = vst [vmem:[#allocation2 + $0x10] sm:$0xff] %v349
    %366 = vst [vmem:[#allocation2 + $0x18] sm:$0xff] %v350
    %367 = vst [vmem:[#allocation2 + $0x20] sm:$0xff] %v351
    %368 = vst [vmem:[#allocation2 + $0x28] sm:$0xff] %v352
    %369 = vst [vmem:[#allocation2 + $0x30] sm:$0xff] %v353
    %370 = vst [vmem:[#allocation2 + $0x38] sm:$0xff] %v354
    %371 = vst [vmem:[#allocation2 + $0x40] sm:$0xff] %v355
    %372 = vst [vmem:[#allocation2 + $0x48] sm:$0xff] %v356
    %373 = vst [vmem:[#allocation2 + $0x50] sm:$0xff] %v357
    %374 = vst [vmem:[#allocation2 + $0x58] sm:$0xff] %v358
    %375 = vst [vmem:[#allocation2 + $0x60] sm:$0xff] %v359
    %376 = vst [vmem:[#allocation2 + $0x68] sm:$0xff] %v360
    %377 = vst [vmem:[#allocation2 + $0x70] sm:$0xff] %v361
    %378 = vst [vmem:[#allocation2 + $0x78] sm:$0xff] %v362
    // Predicated region
    $region46: #{tpu_custom_call.1} parent=1 // pred_check
      %p379 = pneg %p86
    $region47: #{tpu_custom_call.1} parent=1 // pred_check_branch
      %381 = sbr.rel (%p379) target = $region49
    $region48: #{tpu_custom_call.1} parent=1 // pred_region
      %v382 = vld [vmem:[#allocation2] sm:$0xff]
      %v383 = vld [vmem:[#allocation2 + $0x8] sm:$0xff]
      %v384 = vld [vmem:[#allocation2 + $0x10] sm:$0xff]
      %v385 = vld [vmem:[#allocation2 + $0x18] sm:$0xff]
      %v386 = vld [vmem:[#allocation2 + $0x20] sm:$0xff]
      %v387 = vld [vmem:[#allocation2 + $0x28] sm:$0xff]
      %v388 = vld [vmem:[#allocation2 + $0x30] sm:$0xff]
      %v389 = vld [vmem:[#allocation2 + $0x38] sm:$0xff]
      %v390 = vld [vmem:[#allocation2 + $0x40] sm:$0xff]
      %v391 = vld [vmem:[#allocation2 + $0x48] sm:$0xff]
      %v392 = vld [vmem:[#allocation2 + $0x50] sm:$0xff]
      %v393 = vld [vmem:[#allocation2 + $0x58] sm:$0xff]
      %v394 = vld [vmem:[#allocation2 + $0x60] sm:$0xff]
      %v395 = vld [vmem:[#allocation2 + $0x68] sm:$0xff]
      %v396 = vld [vmem:[#allocation2 + $0x70] sm:$0xff]
      %v397 = vld [vmem:[#allocation2 + $0x78] sm:$0xff]
      %v398 = vld [vmem:[#allocation8] sm:$0x1]
      %v400 = vlaneseq
      %v401 = vshrl.u32 %v400, 7
      %v402 = vsub.s32 0, %v401
      %v403 = vrot.slane %v398, %v402
      %v405 = vadd.f32 %v382, %v403
      %v406 = vadd.f32 %v383, %v403
      %v407 = vadd.f32 %v384, %v403
      %v408 = vadd.f32 %v385, %v403
      %v409 = vadd.f32 %v386, %v403
      %v410 = vadd.f32 %v387, %v403
      %v411 = vadd.f32 %v388, %v403
      %v412 = vadd.f32 %v389, %v403
      %v413 = vadd.f32 %v390, %v403
      %v414 = vadd.f32 %v391, %v403
      %v415 = vadd.f32 %v392, %v403
      %v416 = vadd.f32 %v393, %v403
      %v417 = vadd.f32 %v394, %v403
      %v418 = vadd.f32 %v395, %v403
      %v419 = vadd.f32 %v396, %v403
      %v420 = vadd.f32 %v397, %v403
      %v421 = vmax.f32 %v405, 0.0
      %v422 = vmax.f32 %v406, 0.0
      %v423 = vmax.f32 %v407, 0.0
      %v424 = vmax.f32 %v408, 0.0
      %v425 = vmax.f32 %v409, 0.0
      %v426 = vmax.f32 %v410, 0.0
      %v427 = vmax.f32 %v411, 0.0
      %v428 = vmax.f32 %v412, 0.0
      %v429 = vmax.f32 %v413, 0.0
      %v430 = vmax.f32 %v414, 0.0
      %v431 = vmax.f32 %v415, 0.0
      %v432 = vmax.f32 %v416, 0.0
      %v433 = vmax.f32 %v417, 0.0
      %v434 = vmax.f32 %v418, 0.0
      %v435 = vmax.f32 %v419, 0.0
      %v436 = vmax.f32 %v420, 0.0
      %v437 = vpack.c.bf16 %v422, %v421
      %v438 = vpack.c.bf16 %v424, %v423
      %v439 = vpack.c.bf16 %v426, %v425
      %v440 = vpack.c.bf16 %v428, %v427
      %v441 = vpack.c.bf16 %v430, %v429
      %v442 = vpack.c.bf16 %v432, %v431
      %v443 = vpack.c.bf16 %v434, %v433
      %v444 = vpack.c.bf16 %v436, %v435
      %v445 = vld [vmem:[#allocation9] sm:$0xf]
      %v446 = vld [vmem:[#allocation9 + $0x4] sm:$0xf]
      %v447 = vld [vmem:[#allocation9 + $0x8] sm:$0xf]
      %v448 = vld [vmem:[#allocation9 + $0xc] sm:$0xf]
      %v449 = vld [vmem:[#allocation9 + $0x10] sm:$0xf]
      %v450 = vld [vmem:[#allocation9 + $0x14] sm:$0xf]
      %v451 = vld [vmem:[#allocation9 + $0x18] sm:$0xf]
      %v452 = vld [vmem:[#allocation9 + $0x1c] sm:$0xf]
      %v453 = vld [vmem:[#allocation9 + $0x20] sm:$0xf]
      %v454 = vld [vmem:[#allocation9 + $0x24] sm:$0xf]
      %v455 = vld [vmem:[#allocation9 + $0x28] sm:$0xf]
      %v456 = vld [vmem:[#allocation9 + $0x2c] sm:$0xf]
      %v457 = vld [vmem:[#allocation9 + $0x30] sm:$0xf]
      %v458 = vld [vmem:[#allocation9 + $0x34] sm:$0xf]
      %v459 = vld [vmem:[#allocation9 + $0x38] sm:$0xf]
      %v460 = vld [vmem:[#allocation9 + $0x3c] sm:$0xf]
      %v461 = vld [vmem:[#allocation11] sm:$0x1]
      %v463 = vlaneseq
      %v464 = vshrl.u32 %v463, 7
      %v465 = vsub.s32 0, %v464
      %v466 = vrot.slane %v461, %v465
      %v484 = vunpack.c.l.b16 %v445
      %v485 = vunpack.c.l.b16 %v446
      %v486 = vunpack.c.l.b16 %v447
      %v487 = vunpack.c.l.b16 %v448
      %v488 = vunpack.c.l.b16 %v449
      %v489 = vunpack.c.l.b16 %v450
      %v490 = vunpack.c.l.b16 %v451
      %v491 = vunpack.c.l.b16 %v452
      %v492 = vunpack.c.l.b16 %v453
      %v493 = vunpack.c.l.b16 %v454
      %v494 = vunpack.c.l.b16 %v455
      %v495 = vunpack.c.l.b16 %v456
      %v496 = vunpack.c.l.b16 %v457
      %v497 = vunpack.c.l.b16 %v458
      %v498 = vunpack.c.l.b16 %v459
      %v499 = vunpack.c.l.b16 %v460
      %v500 = vpack.c.b16 %v485, %v484
      %v501 = vpack.c.b16 %v487, %v486
      %v502 = vpack.c.b16 %v489, %v488
      %v503 = vpack.c.b16 %v491, %v490
      %v504 = vpack.c.b16 %v493, %v492
      %v505 = vpack.c.b16 %v495, %v494
      %v506 = vpack.c.b16 %v497, %v496
      %v507 = vpack.c.b16 %v499, %v498
      %516 = vmatprep.subr.bf16.mxu0 0
      %517 = vmatpush1.bf16.msra.mxu0 %v500
      %518 = vmatprep.subr.bf16.mxu0 0
      %519 = vmatpush1.bf16.msra.mxu0 %v501
      %520 = vmatprep.subr.bf16.mxu0 0
      %521 = vmatpush1.bf16.msra.mxu0 %v502
      %522 = vmatprep.subr.bf16.mxu0 0
      %523 = vmatpush1.bf16.msra.mxu0 %v503
      %524 = vmatprep.subr.bf16.mxu0 0
      %525 = vmatpush1.bf16.msra.mxu0 %v504
      %526 = vmatprep.subr.bf16.mxu0 0
      %527 = vmatpush1.bf16.msra.mxu0 %v505
      %528 = vmatprep.subr.bf16.mxu0 0
      %529 = vmatpush1.bf16.msra.mxu0 %v506
      %530 = vmatprep.subr.bf16.mxu0 0
      %531 = vmatpush1.bf16.msra.mxu0 %v507
      %532 = vmatprep.subr.bf16.mxu0 0
      %533 = vmatpush1.bf16.msra.mxu0 0
      %534 = vmatprep.subr.bf16.mxu0 0
      %535 = vmatpush1.bf16.msra.mxu0 0
      %536 = vmatprep.subr.bf16.mxu0 0
      %537 = vmatpush1.bf16.msra.mxu0 0
      %538 = vmatprep.subr.bf16.mxu0 0
      %539 = vmatpush1.bf16.msra.mxu0 0
      %540 = vmatprep.subr.bf16.mxu0 0
      %541 = vmatpush1.bf16.msra.mxu0 0
      %542 = vmatprep.subr.bf16.mxu0 0
      %543 = vmatpush1.bf16.msra.mxu0 0
      %544 = vmatprep.subr.bf16.mxu0 0
      %545 = vmatpush1.bf16.msra.mxu0 0
      %546 = vmatprep.subr.bf16.mxu0 0
      %547 = vmatpush1.bf16.msra.mxu0 0
      %548 = vmatprep.mubr.bf16.mxu0 0
      %549 = vmatmul.mubr.bf16.gmra.mrb[0].mxu0 %v437
      %v550 = vpop.f32.mrb[0].mxu0
      %v551 = vadd.f32 %v466, %v550
      %v552 = vpop.f32.mrb[0].mxu0
      %v553 = vpop.f32.mrb[0].mxu0
      %v554 = vadd.f32 %v466, %v553
      %v555 = vpop.f32.mrb[0].mxu0
      %556 = vmatprep.mubr.bf16.mxu0 0
      %557 = vmatmul.mubr.bf16.gmra.mrb[0].mxu0 %v438
      %v558 = vpop.f32.mrb[0].mxu0
      %v559 = vadd.f32 %v466, %v558
      %v560 = vpop.f32.mrb[0].mxu0
      %v561 = vpop.f32.mrb[0].mxu0
      %v562 = vadd.f32 %v466, %v561
      %v563 = vpop.f32.mrb[0].mxu0
      %564 = vmatprep.mubr.bf16.mxu0 0
      %565 = vmatmul.mubr.bf16.gmra.mrb[0].mxu0 %v439
      %v566 = vpop.f32.mrb[0].mxu0
      %v567 = vadd.f32 %v466, %v566
      %v568 = vpop.f32.mrb[0].mxu0
      %v569 = vpop.f32.mrb[0].mxu0
      %v570 = vadd.f32 %v466, %v569
      %v571 = vpop.f32.mrb[0].mxu0
      %572 = vmatprep.mubr.bf16.mxu0 0
      %573 = vmatmul.mubr.bf16.gmra.mrb[0].mxu0 %v440
      %v574 = vpop.f32.mrb[0].mxu0
      %v575 = vadd.f32 %v466, %v574
      %v576 = vpop.f32.mrb[0].mxu0
      %v577 = vpop.f32.mrb[0].mxu0
      %v578 = vadd.f32 %v466, %v577
      %v579 = vpop.f32.mrb[0].mxu0
      %580 = vmatprep.mubr.bf16.mxu0 0
      %581 = vmatmul.mubr.bf16.gmra.mrb[0].mxu0 %v441
      %v582 = vpop.f32.mrb[0].mxu0
      %v583 = vadd.f32 %v466, %v582
      %v584 = vpop.f32.mrb[0].mxu0
      %v585 = vpop.f32.mrb[0].mxu0
      %v586 = vadd.f32 %v466, %v585
      %v587 = vpop.f32.mrb[0].mxu0
      %588 = vmatprep.mubr.bf16.mxu0 0
      %589 = vmatmul.mubr.bf16.gmra.mrb[0].mxu0 %v442
      %v590 = vpop.f32.mrb[0].mxu0
      %v591 = vadd.f32 %v466, %v590
      %v592 = vpop.f32.mrb[0].mxu0
      %v593 = vpop.f32.mrb[0].mxu0
      %v594 = vadd.f32 %v466, %v593
      %v595 = vpop.f32.mrb[0].mxu0
      %596 = vmatprep.mubr.bf16.mxu0 0
      %597 = vmatmul.mubr.bf16.gmra.mrb[0].mxu0 %v443
      %v598 = vpop.f32.mrb[0].mxu0
      %v599 = vadd.f32 %v466, %v598
      %v600 = vpop.f32.mrb[0].mxu0
      %v601 = vpop.f32.mrb[0].mxu0
      %v602 = vadd.f32 %v466, %v601
      %v603 = vpop.f32.mrb[0].mxu0
      %604 = vmatprep.mubr.bf16.mxu0 0
      %605 = vmatmul.mubr.bf16.gmra.mrb[0].mxu0 %v444
      %v606 = vpop.f32.mrb[0].mxu0
      %v607 = vadd.f32 %v466, %v606
      %v608 = vpop.f32.mrb[0].mxu0
      %v609 = vpop.f32.mrb[0].mxu0
      %v610 = vadd.f32 %v466, %v609
      %v611 = vpop.f32.mrb[0].mxu0
      %612 = vdwg.mxu0
      %v613 = vmax.f32 %v551, 0.0
      %v614 = vmax.f32 %v554, 0.0
      %v615 = vmax.f32 %v559, 0.0
      %v616 = vmax.f32 %v562, 0.0
      %v617 = vmax.f32 %v567, 0.0
      %v618 = vmax.f32 %v570, 0.0
      %v619 = vmax.f32 %v575, 0.0
      %v620 = vmax.f32 %v578, 0.0
      %v621 = vmax.f32 %v583, 0.0
      %v622 = vmax.f32 %v586, 0.0
      %v623 = vmax.f32 %v591, 0.0
      %v624 = vmax.f32 %v594, 0.0
      %v625 = vmax.f32 %v599, 0.0
      %v626 = vmax.f32 %v602, 0.0
      %v627 = vmax.f32 %v607, 0.0
      %v628 = vmax.f32 %v610, 0.0
      %629 = vst [vmem:[#allocation12] sm:$0xff] %v613
      %630 = vst [vmem:[#allocation12 + $0x8] sm:$0xff] %v614
      %631 = vst [vmem:[#allocation12 + $0x10] sm:$0xff] %v615
      %632 = vst [vmem:[#allocation12 + $0x18] sm:$0xff] %v616
      %633 = vst [vmem:[#allocation12 + $0x20] sm:$0xff] %v617
      %634 = vst [vmem:[#allocation12 + $0x28] sm:$0xff] %v618
      %635 = vst [vmem:[#allocation12 + $0x30] sm:$0xff] %v619
      %636 = vst [vmem:[#allocation12 + $0x38] sm:$0xff] %v620
      %637 = vst [vmem:[#allocation12 + $0x40] sm:$0xff] %v621
      %638 = vst [vmem:[#allocation12 + $0x48] sm:$0xff] %v622
      %639 = vst [vmem:[#allocation12 + $0x50] sm:$0xff] %v623
      %640 = vst [vmem:[#allocation12 + $0x58] sm:$0xff] %v624
      %641 = vst [vmem:[#allocation12 + $0x60] sm:$0xff] %v625
      %642 = vst [vmem:[#allocation12 + $0x68] sm:$0xff] %v626
      %643 = vst [vmem:[#allocation12 + $0x70] sm:$0xff] %v627
      %644 = vst [vmem:[#allocation12 + $0x78] sm:$0xff] %v628
    $region49: #{tpu_custom_call.1} parent=1 // pred_fallthru
      _
    // Predicated region
    $region50: #{tpu_custom_call.1} parent=1 // pred_check
      _
    $region51: #{tpu_custom_call.1} parent=1 // pred_check_branch
      %646 = sbr.rel (0) target = $region53
    $region52: #{tpu_custom_call.1} parent=1 // pred_region
      %s648 = ssub.s32 2048, 2048
      %649 = vsyncadd [#allocation5], %s648
      %s650 = sshll.u32 [#allocation12], 4
      %s651 = int_to_ptr.vmem [resolvable:$true] %s650
      %656 = dma.vmem_to_hbm [thread:$0]  %s651, 2048, %s5, [#allocation5], 128, 128, 8
    $region53: #{tpu_custom_call.1} parent=1 // pred_fallthru
      _
    // Predicated region
    $region54: #{tpu_custom_call.1} parent=1 // pred_check
      _
    $region55: #{tpu_custom_call.1} parent=1 // pred_check_branch
      %658 = sbr.rel (0) target = $region57
    $region56: #{tpu_custom_call.1} parent=1 // pred_region
      %659 = dma.done [#allocation5], 2048
    $region57: #{tpu_custom_call.1} parent=1 // pred_fallthru
      _
    %660 = vsyncpa [#allocation4], 1
    %661 = vsyncpa [#allocation7], 1
    %662 = vsyncpa [#allocation10], 1
    %663 = vsyncpa [#allocation5], 1

</llo_original>
